<compile_context>
chip_gen: v5e
topology: v5e:2x2
jax: 0.10.0
libtpu: 0.0.40
codegen_flags: <defaults>
</compile_context>

<pallas_src>
import functools

import jax
import jax.numpy as jnp
from jax import lax
from jax.experimental import pallas as pl
from jax.experimental.pallas import tpu as pltpu


# ---------------------------------------------------------------------------
# Pallas kernel: LayerNorm + Q / fused-KV projections + batched MHA + out proj
# ---------------------------------------------------------------------------
def _attn_core_kernel(x_ref, xsr_ref, wq_ref, wkv_ref, bkv_ref, wo_ref, bo_ref,
                      out_ref, *, B, N, M, H, hs):
    """
    x_ref   : (B*N, C)   query-source tokens
    xsr_ref : (B*M, C)   spatially-reduced tokens (pre-LayerNorm)
    wq_ref  : (C, C)     q weight, (in, out) layout, pre-scaled by head_dim**-0.5
    wkv_ref : (C, 2C)    fused kv weight, (in, out) layout, LayerNorm gamma folded in
                         ([:, :C]->K, [:, C:]->V)
    bkv_ref : (1, 2C)    LayerNorm beta folded through the kv weight
    wo_ref  : (C, C)     output projection weight, (in, out) layout
    bo_ref  : (1, C)     output projection bias
    out_ref : (B*N, C)
    """
    C = H * hs

    x = x_ref[...].astype(jnp.float32)
    xsr = xsr_ref[...].astype(jnp.float32)

    # LayerNorm statistics only (gamma/beta folded into wkv/bkv); rsqrt -> EUP.
    mu = jnp.mean(xsr, axis=-1, keepdims=True)
    xc = xsr - mu
    var = jnp.mean(xc * xc, axis=-1, keepdims=True)
    xn = xc * lax.rsqrt(var + 1e-5)

    # Projections on the MXU: one matmul for Q, one FUSED matmul for K and V.
    q = jnp.dot(x, wq_ref[...], preferred_element_type=jnp.float32)       # (B*N, C)
    kv = (jnp.dot(xn, wkv_ref[...], preferred_element_type=jnp.float32)
          + bkv_ref[...])                                                 # (B*M, 2C)

    q3 = q.reshape(B, N, C)
    k3 = kv[:, :C].reshape(B, M, C)
    v3 = kv[:, C:].reshape(B, M, C)

    # Head-major batch (H*B, tokens, head_dim) built with static lane slices +
    # an axis-0 concat: pure in-register relayout, no scratch, no 4-D transpose.
    qh = jnp.concatenate([q3[:, :, h * hs:(h + 1) * hs] for h in range(H)], axis=0)
    kh = jnp.concatenate([k3[:, :, h * hs:(h + 1) * hs] for h in range(H)], axis=0)
    vh = jnp.concatenate([v3[:, :, h * hs:(h + 1) * hs] for h in range(H)], axis=0)

    # ONE batched score matmul over all B*H heads (contracts head_dim of both
    # operands directly -> no materialized k.T), ONE softmax, ONE batched P@V.
    # (scale is already folded into wq_ref)
    s = jnp.einsum('bqd,bkd->bqk', qh, kh,
                   preferred_element_type=jnp.float32)                    # (H*B, N, M)
    m = jnp.max(s, axis=-1, keepdims=True)
    p = jnp.exp(s - m)
    l = jnp.sum(p, axis=-1, keepdims=True)
    o = jnp.einsum('bqk,bkd->bqd', p, vh,
                   preferred_element_type=jnp.float32)                    # (H*B, N, hs)
    # Normalization folded after P@V; divide goes to the EUP (approx reciprocal).
    o = o * pl.reciprocal(l, approx=True)

    # Re-assemble heads along channels, all in registers, one final store.
    att = jnp.concatenate([o[h * B:(h + 1) * B] for h in range(H)], axis=-1)  # (B, N, C)
    att = att.reshape(B * N, C)

    out = jnp.dot(att, wo_ref[...], preferred_element_type=jnp.float32) + bo_ref[...]
    out_ref[...] = out.astype(out_ref.dtype)


def _attention_core(x2d, xsr2d, kp, *, B, N, M, num_heads):
    C = x2d.shape[1]
    hs = C // num_heads
    kernel = functools.partial(_attn_core_kernel, B=B, N=N, M=M, H=num_heads, hs=hs)
    vmem = pl.BlockSpec(memory_space=pltpu.MemorySpace.VMEM)
    return pl.pallas_call(
        kernel,
        out_shape=jax.ShapeDtypeStruct((B * N, C), x2d.dtype),
        in_specs=[vmem] * 7,
        out_specs=vmem,
    )(x2d, xsr2d, kp['wq_s'], kp['wkv_g'], kp['bkv'], kp['wo_t'], kp['bo'])


# ---------------------------------------------------------------------------
# Spatial-reduction branch (plain JAX; see TODO(synk) above)
# ---------------------------------------------------------------------------
def _conv2d(x, w, b, *, stride, padding, dilation):
    out = lax.conv_general_dilated(
        x, w, window_strides=(stride, stride),
        padding=[(padding, padding), (padding, padding)],
        rhs_dilation=(dilation, dilation),
        dimension_numbers=('NCHW', 'OIHW', 'NCHW'))
    return out + b[None, :, None, None]


def _depthwise_conv2d(x, w, b):
    C = x.shape[1]
    out = lax.conv_general_dilated(
        x, w, window_strides=(1, 1), padding=[(1, 1), (1, 1)],
        dimension_numbers=('NCHW', 'OIHW', 'NCHW'),
        feature_group_count=C)
    return out + b[None, :, None, None]


def _spatial_reduction(x, p):
    """sr1..sr4 (+ bias) -> PosCNN (depthwise 3x3 + residual) -> channel concat.
    Returns the pre-LayerNorm reduced tokens x_sr of shape (B, M, C)."""
    B, N, C = x.shape
    Hs = Ws = int(N ** 0.5)
    C4 = C // 4
    xs = jnp.transpose(x, (0, 2, 1)).reshape(B, C, Hs, Ws)
    pads = [0, 1, 2, 3]
    dils = [1, 1, 2, 3]
    outs = []
    for i in range(4):
        xi = xs[:, i * C4:(i + 1) * C4]
        y = _conv2d(xi, p[f'sr{i+1}_w'], p[f'sr{i+1}_b'],
                    stride=2, padding=pads[i], dilation=dils[i])
        # PosCNN with s=1: depthwise 3x3 conv + residual (token<->spatial
        # round-trips in the PyTorch code cancel out).
        posy = _depthwise_conv2d(y, p[f'pos{i+1}_w'], p[f'pos{i+1}_b']) + y
        outs.append(posy.reshape(B, C4, -1).transpose(0, 2, 1))          # (B, M, C4)
    return jnp.concatenate(outs, axis=2)                                 # (B, M, C)


# ---------------------------------------------------------------------------
# Full forward (dropouts have p=0.0 -> identity)
# ---------------------------------------------------------------------------
@functools.partial(jax.jit, static_argnames=("num_heads",))
def attention_forward(x, params, kparams, *, num_heads):
    B, N, C = x.shape
    x_sr = _spatial_reduction(x, params)                 # (B, M, C), pre-LayerNorm
    M = x_sr.shape[1]
    out2d = _attention_core(x.reshape(B * N, C), x_sr.reshape(B * M, C),
                            kparams, B=B, N=N, M=M, num_heads=num_heads)
    return out2d.reshape(B, N, C)


# ---------------------------------------------------------------------------
# Parameters (PyTorch layouts) + one-time kernel layout / folding
# ---------------------------------------------------------------------------
def make_params(key, dim):
    C = dim
    C4 = C // 4
    keys = iter(jax.random.split(key, 32))

    def nrm(shape, s=0.05):
        return s * jax.random.normal(next(keys), shape, dtype=jnp.float32)

    p = {
        'wq': nrm((C, C)),            # nn.Linear(dim, dim, bias=False)
        'wkv': nrm((2 * C, C)),       # nn.Linear(dim, 2*dim, bias=False)
        'wproj': nrm((C, C)),         # nn.Linear(dim, dim)
        'bproj': nrm((C,)),
        'ln_g': 1.0 + nrm((C,), 0.1),
        'ln_b': nrm((C,), 0.1),
    }
    ksizes = [1, 3, 3, 3]
    for i in range(4):
        p[f'sr{i+1}_w'] = nrm((C4, C4, ksizes[i], ksizes[i]), 0.2)
        p[f'sr{i+1}_b'] = nrm((C4,), 0.1)
        p[f'pos{i+1}_w'] = nrm((C4, 1, 3, 3), 0.2)        # depthwise
        p[f'pos{i+1}_b'] = nrm((C4,), 0.1)
    return p


def make_kernel_params(p, num_heads):
    """Lay out + fold the projection/LayerNorm params for the kernel ONCE.

    Folds:
      * attention scale (head_dim**-0.5) into the Q weight,
      * LayerNorm gamma into the KV weight rows,
      * LayerNorm beta through the KV weight into a KV bias,
    so the kernel skips the per-element affine and per-score scaling.
    """
    C = p['wq'].shape[0]
    hs = C // num_heads
    scale = float(hs) ** -0.5
    wq_t = jnp.asarray(p['wq'].T)                  # (C, C)   (in, out)
    wkv_t = jnp.asarray(p['wkv'].T)                # (C, 2C)  (in, out)
    return {
        'wq_s': wq_t * scale,                      # scale folded into Wq
        'wkv_g': p['ln_g'][:, None] * wkv_t,       # gamma folded into Wkv
        'bkv': (p['ln_b'] @ wkv_t).reshape(1, 2 * C),   # beta folded -> kv bias
        'wo_t': jnp.asarray(p['wproj'].T),         # (C, C)   (in, out)
        'bo': p['bproj'].reshape(1, C),
    }


# ---------------------------------------------------------------------------
# Pure-JAX reference (mirrors the PyTorch forward; attention core independent)
# ---------------------------------------------------------------------------
def _reference_forward(x, params, *, num_heads):
    B, N, C = x.shape
    hs = C // num_heads
    x_sr = _spatial_reduction(x, params)
    mu = x_sr.mean(-1, keepdims=True)
    var = ((x_sr - mu) ** 2).mean(-1, keepdims=True)
    xn = (x_sr - mu) / jnp.sqrt(var + 1e-5) * params['ln_g'] + params['ln_b']
    q = x @ params['wq'].T
    kv = xn @ params['wkv'].T
    k, v = kv[..., :C], kv[..., C:]
    qh = q.reshape(B, N, num_heads, hs).transpose(0, 2, 1, 3)
    kh = k.reshape(B, -1, num_heads, hs).transpose(0, 2, 1, 3)
    vh = v.reshape(B, -1, num_heads, hs).transpose(0, 2, 1, 3)
    att = jnp.einsum('bhqd,bhkd->bhqk', qh, kh) * (hs ** -0.5)
    att = jax.nn.softmax(att, axis=-1)
    o = jnp.einsum('bhqk,bhkd->bhqd', att, vh)
    o = o.transpose(0, 2, 1, 3).reshape(B, N, C)
    return o @ params['wproj'].T + params['bproj']


if __name__ == "__main__":
    dim = 32          # C  (module default 512; small but shape-consistent)
    num_heads = 4     # head_dim = 8
    B = 2
    N = 16            # H = W = 4 ; sr_ratio = 2 -> reduced tokens M = 4

    key = jax.random.PRNGKey(0)
    kx, kp = jax.random.split(key)
    x = jax.random.normal(kx, (B, N, dim), dtype=jnp.float32)
    params = make_params(kp, dim)
    kparams = make_kernel_params(params, num_heads)   # laid out/folded once

    out = attention_forward(x, params, kparams, num_heads=num_heads)
    out = jax.block_until_ready(out)

    ref = _reference_forward(x, params, num_heads=num_heads)
    assert out.shape == (B, N, dim)
    # Slightly loosened tolerance: softmax denominator uses the EUP approximate
    # reciprocal (pl.reciprocal(approx=True)) and gamma/beta/scale are folded
    # into the projection weights (mathematically identical, fp-rounding only).
    assert jnp.allclose(out, ref, atol=2e-3, rtol=2e-3), "mismatch vs reference"

    print("KERNEL_OK")
</pallas_src>

<mosaic_0001>
module attributes {stable_mosaic.version = 11 : i64} {
  func.func @_attn_core_kernel(%arg0: memref<32x32xf32, #tpu.memory_space<vmem>>, %arg1: memref<8x32xf32, #tpu.memory_space<vmem>>, %arg2: memref<32x32xf32, #tpu.memory_space<vmem>>, %arg3: memref<32x64xf32, #tpu.memory_space<vmem>>, %arg4: memref<1x64xf32, #tpu.memory_space<vmem>>, %arg5: memref<32x32xf32, #tpu.memory_space<vmem>>, %arg6: memref<1x32xf32, #tpu.memory_space<vmem>>, %arg7: memref<32x32xf32, #tpu.memory_space<vmem>>) attributes {dimension_semantics = [], scalar_prefetch = 0 : i64, scratch_operands = 0 : i64, tpu.core_type = #tpu.core_type<tc>} {
    %c0 = arith.constant 0 : index
    %c0_0 = arith.constant 0 : index
    %0 = vector.load %arg0[%c0, %c0_0] : memref<32x32xf32, #tpu.memory_space<vmem>>, vector<32x32xf32>
    %c0_1 = arith.constant 0 : index
    %c0_2 = arith.constant 0 : index
    %1 = vector.load %arg1[%c0_1, %c0_2] : memref<8x32xf32, #tpu.memory_space<vmem>>, vector<8x32xf32>
    %cst = arith.constant dense<0.000000e+00> : vector<8xf32>
    %2 = vector.multi_reduction <add>, %1, %cst [1] : vector<8x32xf32> to vector<8xf32>
    %3 = vector.shape_cast %2 : vector<8xf32> to vector<8x1xf32>
    %cst_3 = arith.constant 3.200000e+01 : f32
    %4 = vector.broadcast %cst_3 : f32 to vector<8x1xf32>
    %5 = arith.divf %3, %4 : vector<8x1xf32>
    %6 = vector.broadcast %5 : vector<8x1xf32> to vector<8x32xf32>
    %7 = arith.subf %1, %6 : vector<8x32xf32>
    %8 = arith.mulf %7, %7 : vector<8x32xf32>
    %cst_4 = arith.constant dense<0.000000e+00> : vector<8xf32>
    %9 = vector.multi_reduction <add>, %8, %cst_4 [1] : vector<8x32xf32> to vector<8xf32>
    %10 = vector.shape_cast %9 : vector<8xf32> to vector<8x1xf32>
    %cst_5 = arith.constant 3.200000e+01 : f32
    %11 = vector.broadcast %cst_5 : f32 to vector<8x1xf32>
    %12 = arith.divf %10, %11 : vector<8x1xf32>
    %cst_6 = arith.constant 9.99999974E-6 : f32
    %13 = vector.broadcast %cst_6 : f32 to vector<8x1xf32>
    %14 = arith.addf %12, %13 : vector<8x1xf32>
    %15 = math.rsqrt %14 : vector<8x1xf32>
    %16 = vector.broadcast %15 : vector<8x1xf32> to vector<8x32xf32>
    %17 = arith.mulf %7, %16 : vector<8x32xf32>
    %c0_7 = arith.constant 0 : index
    %c0_8 = arith.constant 0 : index
    %18 = vector.load %arg2[%c0_7, %c0_8] : memref<32x32xf32, #tpu.memory_space<vmem>>, vector<32x32xf32>
    %cst_9 = arith.constant dense<0.000000e+00> : vector<32x32xf32>
    %19 = tpu.matmul %0, %18, %cst_9 {dimension_numbers = #tpu.dot_dimension_numbers<[1], [0], [0], [1], [0, 0, 1, 1], [], []>} : vector<32x32xf32>, vector<32x32xf32>, vector<32x32xf32> -> vector<32x32xf32>
    %c0_10 = arith.constant 0 : index
    %c0_11 = arith.constant 0 : index
    %20 = vector.load %arg3[%c0_10, %c0_11] : memref<32x64xf32, #tpu.memory_space<vmem>>, vector<32x64xf32>
    %cst_12 = arith.constant dense<0.000000e+00> : vector<8x64xf32>
    %21 = tpu.matmul %17, %20, %cst_12 {dimension_numbers = #tpu.dot_dimension_numbers<[1], [0], [0], [1], [0, 0, 1, 1], [], []>} : vector<8x32xf32>, vector<32x64xf32>, vector<8x64xf32> -> vector<8x64xf32>
    %c0_13 = arith.constant 0 : index
    %c0_14 = arith.constant 0 : index
    %22 = vector.load %arg4[%c0_13, %c0_14] : memref<1x64xf32, #tpu.memory_space<vmem>>, vector<1x64xf32>
    %23 = vector.broadcast %22 : vector<1x64xf32> to vector<8x64xf32>
    %24 = arith.addf %21, %23 : vector<8x64xf32>
    %25 = vector.shape_cast %19 : vector<32x32xf32> to vector<2x16x32xf32>
    %26 = vector.extract_strided_slice %24 {offsets = [0, 0], sizes = [8, 32], strides = [1, 1]} : vector<8x64xf32> to vector<8x32xf32>
    %27 = vector.shape_cast %26 : vector<8x32xf32> to vector<2x4x32xf32>
    %28 = vector.extract_strided_slice %24 {offsets = [0, 32], sizes = [8, 32], strides = [1, 1]} : vector<8x64xf32> to vector<8x32xf32>
    %29 = vector.shape_cast %28 : vector<8x32xf32> to vector<2x4x32xf32>
    %30 = vector.extract_strided_slice %25 {offsets = [0, 0, 0], sizes = [2, 16, 8], strides = [1, 1, 1]} : vector<2x16x32xf32> to vector<2x16x8xf32>
    %31 = vector.extract_strided_slice %25 {offsets = [0, 0, 8], sizes = [2, 16, 8], strides = [1, 1, 1]} : vector<2x16x32xf32> to vector<2x16x8xf32>
    %32 = vector.extract_strided_slice %25 {offsets = [0, 0, 16], sizes = [2, 16, 8], strides = [1, 1, 1]} : vector<2x16x32xf32> to vector<2x16x8xf32>
    %33 = vector.extract_strided_slice %25 {offsets = [0, 0, 24], sizes = [2, 16, 8], strides = [1, 1, 1]} : vector<2x16x32xf32> to vector<2x16x8xf32>
    %34 = tpu.concatenate %30, %31, %32, %33 in 0 : vector<2x16x8xf32>, vector<2x16x8xf32>, vector<2x16x8xf32>, vector<2x16x8xf32> -> vector<8x16x8xf32>
    %35 = vector.extract_strided_slice %27 {offsets = [0, 0, 0], sizes = [2, 4, 8], strides = [1, 1, 1]} : vector<2x4x32xf32> to vector<2x4x8xf32>
    %36 = vector.extract_strided_slice %27 {offsets = [0, 0, 8], sizes = [2, 4, 8], strides = [1, 1, 1]} : vector<2x4x32xf32> to vector<2x4x8xf32>
    %37 = vector.extract_strided_slice %27 {offsets = [0, 0, 16], sizes = [2, 4, 8], strides = [1, 1, 1]} : vector<2x4x32xf32> to vector<2x4x8xf32>
    %38 = vector.extract_strided_slice %27 {offsets = [0, 0, 24], sizes = [2, 4, 8], strides = [1, 1, 1]} : vector<2x4x32xf32> to vector<2x4x8xf32>
    %39 = tpu.concatenate %35, %36, %37, %38 in 0 : vector<2x4x8xf32>, vector<2x4x8xf32>, vector<2x4x8xf32>, vector<2x4x8xf32> -> vector<8x4x8xf32>
    %40 = vector.extract_strided_slice %29 {offsets = [0, 0, 0], sizes = [2, 4, 8], strides = [1, 1, 1]} : vector<2x4x32xf32> to vector<2x4x8xf32>
    %41 = vector.extract_strided_slice %29 {offsets = [0, 0, 8], sizes = [2, 4, 8], strides = [1, 1, 1]} : vector<2x4x32xf32> to vector<2x4x8xf32>
    %42 = vector.extract_strided_slice %29 {offsets = [0, 0, 16], sizes = [2, 4, 8], strides = [1, 1, 1]} : vector<2x4x32xf32> to vector<2x4x8xf32>
    %43 = vector.extract_strided_slice %29 {offsets = [0, 0, 24], sizes = [2, 4, 8], strides = [1, 1, 1]} : vector<2x4x32xf32> to vector<2x4x8xf32>
    %44 = tpu.concatenate %40, %41, %42, %43 in 0 : vector<2x4x8xf32>, vector<2x4x8xf32>, vector<2x4x8xf32>, vector<2x4x8xf32> -> vector<8x4x8xf32>
    "tpu.trace_start"() <{level = 10 : i32, message = "bqd,bkd->bqk"}> : () -> ()
    %cst_15 = arith.constant dense<0.000000e+00> : vector<8x16x4xf32>
    %45 = tpu.matmul %34, %39, %cst_15 {dimension_numbers = #tpu.dot_dimension_numbers<[2], [2], [1], [1], [0, 0, 0, 1, 1, 1], [0], [0]>} : vector<8x16x8xf32>, vector<8x4x8xf32>, vector<8x16x4xf32> -> vector<8x16x4xf32>
    "tpu.trace_stop"() : () -> ()
    %cst_16 = arith.constant dense<0xFF800000> : vector<8x16xf32>
    %46 = vector.multi_reduction <maximumf>, %45, %cst_16 [2] : vector<8x16x4xf32> to vector<8x16xf32>
    %47 = vector.shape_cast %46 : vector<8x16xf32> to vector<8x16x1xf32>
    %48 = vector.broadcast %47 : vector<8x16x1xf32> to vector<8x16x4xf32>
    %49 = arith.subf %45, %48 : vector<8x16x4xf32>
    %50 = math.exp %49 : vector<8x16x4xf32>
    %cst_17 = arith.constant dense<0.000000e+00> : vector<8x16xf32>
    %51 = vector.multi_reduction <add>, %50, %cst_17 [2] : vector<8x16x4xf32> to vector<8x16xf32>
    %52 = vector.shape_cast %51 : vector<8x16xf32> to vector<8x16x1xf32>
    "tpu.trace_start"() <{level = 10 : i32, message = "bqk,bkd->bqd"}> : () -> ()
    %cst_18 = arith.constant dense<0.000000e+00> : vector<8x16x8xf32>
    %53 = tpu.matmul %50, %44, %cst_18 {dimension_numbers = #tpu.dot_dimension_numbers<[2], [1], [1], [2], [0, 0, 0, 1, 1, 2], [0], [0]>} : vector<8x16x4xf32>, vector<8x4x8xf32>, vector<8x16x8xf32> -> vector<8x16x8xf32>
    "tpu.trace_stop"() : () -> ()
    %54 = tpu.reciprocal %52 {approx = true} : vector<8x16x1xf32> -> vector<8x16x1xf32>
    %55 = vector.broadcast %54 : vector<8x16x1xf32> to vector<8x16x8xf32>
    %56 = arith.mulf %53, %55 : vector<8x16x8xf32>
    %57 = vector.extract_strided_slice %56 {offsets = [0, 0, 0], sizes = [2, 16, 8], strides = [1, 1, 1]} : vector<8x16x8xf32> to vector<2x16x8xf32>
    %58 = vector.extract_strided_slice %56 {offsets = [2, 0, 0], sizes = [2, 16, 8], strides = [1, 1, 1]} : vector<8x16x8xf32> to vector<2x16x8xf32>
    %59 = vector.extract_strided_slice %56 {offsets = [4, 0, 0], sizes = [2, 16, 8], strides = [1, 1, 1]} : vector<8x16x8xf32> to vector<2x16x8xf32>
    %60 = vector.extract_strided_slice %56 {offsets = [6, 0, 0], sizes = [2, 16, 8], strides = [1, 1, 1]} : vector<8x16x8xf32> to vector<2x16x8xf32>
    %61 = tpu.concatenate %57, %58, %59, %60 in 2 : vector<2x16x8xf32>, vector<2x16x8xf32>, vector<2x16x8xf32>, vector<2x16x8xf32> -> vector<2x16x32xf32>
    %62 = vector.shape_cast %61 : vector<2x16x32xf32> to vector<32x32xf32>
    %c0_19 = arith.constant 0 : index
    %c0_20 = arith.constant 0 : index
    %63 = vector.load %arg5[%c0_19, %c0_20] : memref<32x32xf32, #tpu.memory_space<vmem>>, vector<32x32xf32>
    %cst_21 = arith.constant dense<0.000000e+00> : vector<32x32xf32>
    %64 = tpu.matmul %62, %63, %cst_21 {dimension_numbers = #tpu.dot_dimension_numbers<[1], [0], [0], [1], [0, 0, 1, 1], [], []>} : vector<32x32xf32>, vector<32x32xf32>, vector<32x32xf32> -> vector<32x32xf32>
    %c0_22 = arith.constant 0 : index
    %c0_23 = arith.constant 0 : index
    %65 = vector.load %arg6[%c0_22, %c0_23] : memref<1x32xf32, #tpu.memory_space<vmem>>, vector<1x32xf32>
    %66 = vector.broadcast %65 : vector<1x32xf32> to vector<32x32xf32>
    %67 = arith.addf %64, %66 : vector<32x32xf32>
    %c0_24 = arith.constant 0 : index
    %c0_25 = arith.constant 0 : index
    %68 = vector.load %arg7[%c0_24, %c0_25] : memref<32x32xf32, #tpu.memory_space<vmem>>, vector<32x32xf32>
    tpu.vector_store %arg7[%c0_24, %c0_25], %67 {strides = array<i32>} : memref<32x32xf32, #tpu.memory_space<vmem>>, vector<32x32xf32>,
    return
  }
}

</mosaic_0001>

<llo_original>
// kernel: attention_forward.1
$region0: #{attention_forward.1}
  #allocation0 [shape = 'u32[]', space=smem, size = 0x4, offset = 0x4, fixed_abs, tag = 'smem constant byte address 0x4 - core index']
  #allocation1 [shape = 'u32[72,128]{1,0:T(1,128)}', space=vmem, size = 0x9000, scoped, tag = 'internal scratch']
  %s0 = inlined_call_operand.vmem [shape: f32[32,32], index: 0, kind: input, shape index: {}]
  %s1 = inlined_call_operand.vmem [shape: f32[8,32], index: 1, kind: input, shape index: {}]
  %s2 = inlined_call_operand.vmem [shape: f32[32,32], index: 2, kind: input, shape index: {}]
  %s3 = inlined_call_operand.vmem [shape: f32[32,64], index: 3, kind: input, shape index: {}]
  %s4 = inlined_call_operand.vmem [shape: f32[1,64], index: 4, kind: input, shape index: {}]
  %s5 = inlined_call_operand.vmem [shape: f32[32,32], index: 5, kind: input, shape index: {}]
  %s6 = inlined_call_operand.vmem [shape: f32[1,32], index: 6, kind: input, shape index: {}]
  %s7 = inlined_call_operand.hbm [shape: f32[32,32], index: 7, kind: output, shape index: {}]
  %s8 = sld [smem:[#allocation0]]
  $region38: #{attention_forward.1} parent=0
    _
  %s10 = ssub.s32 1, %s8
  %s11 = scalar_select 0, %s10, %s8
  $region1: #{attention_forward.1} parent=0
    #allocation2 [shape = 'u8[16384]{0}', space=vmem, size = 0x4000, scoped, tag = 'output window, operand 0, single buffered']
    #allocation3 [shape = 's32[1]{0}', space=sflag, size = 0x4, scoped, tag = 'scoped memory for attention_forward.1']
    %12 = vsyncpa [#allocation3], 0
    // Predicated region
    $region2: #{attention_forward.1} parent=1 // pred_check
      _
    $region3: #{attention_forward.1} parent=1 // pred_check_branch
      %14 = sbr.rel (0) target = $region5
    $region4: #{attention_forward.1} parent=1 // pred_region
      _
    $region5: #{attention_forward.1} parent=1 // pred_fallthru
      _
    // Predicated region
    $region6: #{attention_forward.1} parent=1 // pred_check
      _
    $region7: #{attention_forward.1} parent=1 // pred_check_branch
      %16 = sbr.rel (0) target = $region9
    $region8: #{attention_forward.1} parent=1 // pred_region
      _
    $region9: #{attention_forward.1} parent=1 // pred_fallthru
      _
    // Predicated region
    $region10: #{attention_forward.1} parent=1 // pred_check
      _
    $region11: #{attention_forward.1} parent=1 // pred_check_branch
      %18 = sbr.rel (0) target = $region13
    $region12: #{attention_forward.1} parent=1 // pred_region
      _
    $region13: #{attention_forward.1} parent=1 // pred_fallthru
      _
    // Predicated region
    $region14: #{attention_forward.1} parent=1 // pred_check
      _
    $region15: #{attention_forward.1} parent=1 // pred_check_branch
      %20 = sbr.rel (0) target = $region17
    $region16: #{attention_forward.1} parent=1 // pred_region
      _
    $region17: #{attention_forward.1} parent=1 // pred_fallthru
      _
    // Predicated region
    $region18: #{attention_forward.1} parent=1 // pred_check
      _
    $region19: #{attention_forward.1} parent=1 // pred_check_branch
      %22 = sbr.rel (0) target = $region21
    $region20: #{attention_forward.1} parent=1 // pred_region
      _
    $region21: #{attention_forward.1} parent=1 // pred_fallthru
      _
    // Predicated region
    $region22: #{attention_forward.1} parent=1 // pred_check
      _
    $region23: #{attention_forward.1} parent=1 // pred_check_branch
      %24 = sbr.rel (0) target = $region25
    $region24: #{attention_forward.1} parent=1 // pred_region
      _
    $region25: #{attention_forward.1} parent=1 // pred_fallthru
      _
    // Predicated region
    $region26: #{attention_forward.1} parent=1 // pred_check
      _
    $region27: #{attention_forward.1} parent=1 // pred_check_branch
      %26 = sbr.rel (0) target = $region29
    $region28: #{attention_forward.1} parent=1 // pred_region
      _
    $region29: #{attention_forward.1} parent=1 // pred_fallthru
      _
    %v27 = vld [vmem:[%s0] sm:$0xff]
    %v28 = vld [vmem:[%s0 + $0x8] sm:$0xff]
    %v29 = vld [vmem:[%s0 + $0x10] sm:$0xff]
    %v30 = vld [vmem:[%s0 + $0x18] sm:$0xff]
    %v31 = vld [vmem:[%s1] sm:$0xff]
    %vm32 = vcmask 261120
    %v33 = vsel %vm32, %v31, 0.0
    %34 = vadd.xlane.f32.xlu0 %v33
    %v35 = vpop.xlane.xlu0 %34
    %v36 = vrcp.pop 32.0
    %v37 = vmul.f32 32.0, %v36
    %v38 = vsub.f32 1.0, %v37
    %v39 = vmul.f32 %v36, %v38
    %v40 = vadd.f32 %v36, %v39
    %vm41 = vweird.f32 %v36
    %v42 = vsel %vm41, %v36, %v40
    %v43 = vmul.f32 %v35, %v42
    %v44 = vsub.f32 %v31, %v43
    %v45 = vmul.f32 %v44, %v44
    %v46 = vsel %vm32, %v45, 0.0
    %47 = vadd.xlane.f32.xlu0 %v46
    %v48 = vpop.xlane.xlu0 %47
    %v49 = vmul.f32 %v48, %v42
    %v50 = vadd.f32 %v49, 1e-05
    %v51 = vrsqrt.pop %v50
    %v52 = vmul.f32 %v51, %v50
    %v53 = vmul.f32 %v52, %v51
    %v54 = vmul.f32 0.5, %v53
    %v55 = vsub.f32 1.5, %v54
    %v56 = vmul.f32 %v51, %v55
    %vm57 = vweird.f32 %v50
    %vm58 = vweird.f32 %v51
    %vm59 = vmor %vm57, %vm58
    %v60 = vsel %vm59, %v51, %v56
    %v61 = vmul.f32 %v44, %v60
    %v62 = vld [vmem:[%s2] sm:$0xff]
    %v63 = vld [vmem:[%s2 + $0x8] sm:$0xff]
    %v64 = vld [vmem:[%s2 + $0x10] sm:$0xff]
    %v65 = vld [vmem:[%s2 + $0x18] sm:$0xff]
    %v67 = vsel %vm32, %v27, 0
    %v70 = vsel %vm32, %v28, 0
    %v73 = vsel %vm32, %v29, 0
    %v76 = vsel %vm32, %v30, 0
    %78 = vmatpush.msra.mxu0 0.0
    %79 = vmatpush.msra.mxu0 0.0
    %80 = vmatpush.msra.mxu0 0.0
    %81 = vmatpush.msra.mxu0 0.0
    %82 = vmatpush.msra.mxu0 0.0
    %83 = vmatpush.msra.mxu0 0.0
    %84 = vmatpush.msra.mxu0 0.0
    %85 = vmatpush.msra.mxu0 0.0
    %86 = vmatpush.msra.mxu0 0.0
    %87 = vmatpush.msra.mxu0 0.0
    %88 = vmatpush.msra.mxu0 0.0
    %89 = vmatpush.msra.mxu0 0.0
    %90 = vmatpush.msra.mxu0 %v65
    %91 = vmatpush.msra.mxu0 %v64
    %92 = vmatpush.msra.mxu0 %v63
    %93 = vmatpush.msra.mxu0 %v62
    %94 = vmatmul.f32.gmra.mxu0 %v67
    %v95 = vpop.f32.mrf.mxu0
    %v96 = vadd.f32 0.0, %v95
    %97 = vmatmul.f32.gmra.mxu0 %v70
    %v98 = vpop.f32.mrf.mxu0
    %v99 = vadd.f32 0.0, %v98
    %100 = vmatmul.f32.gmra.mxu0 %v73
    %v101 = vpop.f32.mrf.mxu0
    %v102 = vadd.f32 0.0, %v101
    %103 = vmatmul.f32.gmra.mxu0 %v76
    %v104 = vpop.f32.mrf.mxu0
    %v105 = vadd.f32 0.0, %v104
    %106 = vdwg.mxu0
    %v107 = vld [vmem:[%s3] sm:$0xff]
    %v108 = vld [vmem:[%s3 + $0x8] sm:$0xff]
    %v109 = vld [vmem:[%s3 + $0x10] sm:$0xff]
    %v110 = vld [vmem:[%s3 + $0x18] sm:$0xff]
    %v111 = vld [vmem:[%s4] sm:$0x1]
    %v113 = vperm.slane %v111, 0
    %v116 = vsel %vm32, %v61, 0
    %118 = vmatpush.msra.mxu0 0.0
    %119 = vmatpush.msra.mxu0 0.0
    %120 = vmatpush.msra.mxu0 0.0
    %121 = vmatpush.msra.mxu0 0.0
    %122 = vmatpush.msra.mxu0 0.0
    %123 = vmatpush.msra.mxu0 0.0
    %124 = vmatpush.msra.mxu0 0.0
    %125 = vmatpush.msra.mxu0 0.0
    %126 = vmatpush.msra.mxu0 0.0
    %127 = vmatpush.msra.mxu0 0.0
    %128 = vmatpush.msra.mxu0 0.0
    %129 = vmatpush.msra.mxu0 0.0
    %130 = vmatpush.msra.mxu0 %v110
    %131 = vmatpush.msra.mxu0 %v109
    %132 = vmatpush.msra.mxu0 %v108
    %133 = vmatpush.msra.mxu0 %v107
    %134 = vmatmul.f32.gmra.mxu0 %v116
    %v135 = vpop.f32.mrf.mxu0
    %v136 = vadd.f32 %v113, %v135
    %137 = vdwg.mxu0
    %v139 = vrot.slane %v136, 4
    %144 = vrot.lane.b32.xlu0 %v96, 120
    %v145 = vpop.permute.xlu0 %144
    %146 = vrot.lane.b32.xlu0 %v99, 120
    %v147 = vpop.permute.xlu0 %146
    %148 = vrot.lane.b32.xlu0 %v102, 120
    %v149 = vpop.permute.xlu0 %148
    %150 = vrot.lane.b32.xlu0 %v105, 120
    %v151 = vpop.permute.xlu0 %150
    %152 = vrot.lane.b32.xlu0 %v96, 112
    %v153 = vpop.permute.xlu0 %152
    %154 = vrot.lane.b32.xlu0 %v99, 112
    %v155 = vpop.permute.xlu0 %154
    %156 = vrot.lane.b32.xlu0 %v102, 112
    %v157 = vpop.permute.xlu0 %156
    %158 = vrot.lane.b32.xlu0 %v105, 112
    %v159 = vpop.permute.xlu0 %158
    %160 = vrot.lane.b32.xlu0 %v96, 104
    %v161 = vpop.permute.xlu0 %160
    %162 = vrot.lane.b32.xlu0 %v99, 104
    %v163 = vpop.permute.xlu0 %162
    %164 = vrot.lane.b32.xlu0 %v102, 104
    %v165 = vpop.permute.xlu0 %164
    %166 = vrot.lane.b32.xlu0 %v105, 104
    %v167 = vpop.permute.xlu0 %166
    %168 = vrot.lane.b32.xlu0 %v136, 120
    %v169 = vpop.permute.xlu0 %168
    %170 = vrot.lane.b32.xlu0 %v139, 120
    %v171 = vpop.permute.xlu0 %170
    %172 = vrot.lane.b32.xlu0 %v136, 112
    %v173 = vpop.permute.xlu0 %172
    %174 = vrot.lane.b32.xlu0 %v139, 112
    %v175 = vpop.permute.xlu0 %174
    %176 = vrot.lane.b32.xlu0 %v136, 104
    %v177 = vpop.permute.xlu0 %176
    %178 = vrot.lane.b32.xlu0 %v139, 104
    %v179 = vpop.permute.xlu0 %178
    %vm180 = vcmask 64512
    %v181 = vsel %vm180, %v96, 0
    %v183 = vsel %vm180, %v99, 0
    %v185 = vsel %vm180, %v136, 0
    %187 = vmatpush.xpose.msra.mxu0 0.0
    %188 = vmatpush.xpose.msra.mxu0 0.0
    %189 = vmatpush.xpose.msra.mxu0 0.0
    %190 = vmatpush.xpose.msra.mxu0 0.0
    %191 = vmatpush.xpose.msra.mxu0 0.0
    %192 = vmatpush.xpose.msra.mxu0 0.0
    %193 = vmatpush.xpose.msra.mxu0 0.0
    %194 = vmatpush.xpose.msra.mxu0 0.0
    %195 = vmatpush.xpose.msra.mxu0 0.0
    %196 = vmatpush.xpose.msra.mxu0 0.0
    %197 = vmatpush.xpose.msra.mxu0 0.0
    %198 = vmatpush.xpose.msra.mxu0 0.0
    %199 = vmatpush.xpose.msra.mxu0 0.0
    %200 = vmatpush.xpose.msra.mxu0 0.0
    %201 = vmatpush.xpose.msra.mxu0 0.0
    %202 = vmatpush.xpose.msra.mxu0 %v185
    %203 = vmatmul.f32.gmra.mxu0 %v181
    %v204 = vpop.f32.mrf.mxu0
    %v205 = vadd.f32 0.0, %v204
    %206 = vmatmul.f32.gmra.mxu0 %v183
    %v207 = vpop.f32.mrf.mxu0
    %v208 = vadd.f32 0.0, %v207
    %209 = vdwg.mxu0
    %v210 = vsel %vm180, %v102, 0
    %v212 = vsel %vm180, %v105, 0
    %v214 = vsel %vm180, %v139, 0
    %216 = vmatpush.xpose.msra.mxu0 0.0
    %217 = vmatpush.xpose.msra.mxu0 0.0
    %218 = vmatpush.xpose.msra.mxu0 0.0
    %219 = vmatpush.xpose.msra.mxu0 0.0
    %220 = vmatpush.xpose.msra.mxu0 0.0
    %221 = vmatpush.xpose.msra.mxu0 0.0
    %222 = vmatpush.xpose.msra.mxu0 0.0
    %223 = vmatpush.xpose.msra.mxu0 0.0
    %224 = vmatpush.xpose.msra.mxu0 0.0
    %225 = vmatpush.xpose.msra.mxu0 0.0
    %226 = vmatpush.xpose.msra.mxu0 0.0
    %227 = vmatpush.xpose.msra.mxu0 0.0
    %228 = vmatpush.xpose.msra.mxu0 0.0
    %229 = vmatpush.xpose.msra.mxu0 0.0
    %230 = vmatpush.xpose.msra.mxu0 0.0
    %231 = vmatpush.xpose.msra.mxu0 %v214
    %232 = vmatmul.f32.gmra.mxu0 %v210
    %v233 = vpop.f32.mrf.mxu0
    %v234 = vadd.f32 0.0, %v233
    %235 = vmatmul.f32.gmra.mxu0 %v212
    %v236 = vpop.f32.mrf.mxu0
    %v237 = vadd.f32 0.0, %v236
    %238 = vdwg.mxu0
    %v239 = vsel %vm180, %v145, 0
    %v241 = vsel %vm180, %v147, 0
    %v243 = vsel %vm180, %v169, 0
    %245 = vmatpush.xpose.msra.mxu0 0.0
    %246 = vmatpush.xpose.msra.mxu0 0.0
    %247 = vmatpush.xpose.msra.mxu0 0.0
    %248 = vmatpush.xpose.msra.mxu0 0.0
    %249 = vmatpush.xpose.msra.mxu0 0.0
    %250 = vmatpush.xpose.msra.mxu0 0.0
    %251 = vmatpush.xpose.msra.mxu0 0.0
    %252 = vmatpush.xpose.msra.mxu0 0.0
    %253 = vmatpush.xpose.msra.mxu0 0.0
    %254 = vmatpush.xpose.msra.mxu0 0.0
    %255 = vmatpush.xpose.msra.mxu0 0.0
    %256 = vmatpush.xpose.msra.mxu0 0.0
    %257 = vmatpush.xpose.msra.mxu0 0.0
    %258 = vmatpush.xpose.msra.mxu0 0.0
    %259 = vmatpush.xpose.msra.mxu0 0.0
    %260 = vmatpush.xpose.msra.mxu0 %v243
    %261 = vmatmul.f32.gmra.mxu0 %v239
    %v262 = vpop.f32.mrf.mxu0
    %v263 = vadd.f32 0.0, %v262
    %264 = vmatmul.f32.gmra.mxu0 %v241
    %v265 = vpop.f32.mrf.mxu0
    %v266 = vadd.f32 0.0, %v265
    %267 = vdwg.mxu0
    %v268 = vsel %vm180, %v149, 0
    %v270 = vsel %vm180, %v151, 0
    %v272 = vsel %vm180, %v171, 0
    %274 = vmatpush.xpose.msra.mxu0 0.0
    %275 = vmatpush.xpose.msra.mxu0 0.0
    %276 = vmatpush.xpose.msra.mxu0 0.0
    %277 = vmatpush.xpose.msra.mxu0 0.0
    %278 = vmatpush.xpose.msra.mxu0 0.0
    %279 = vmatpush.xpose.msra.mxu0 0.0
    %280 = vmatpush.xpose.msra.mxu0 0.0
    %281 = vmatpush.xpose.msra.mxu0 0.0
    %282 = vmatpush.xpose.msra.mxu0 0.0
    %283 = vmatpush.xpose.msra.mxu0 0.0
    %284 = vmatpush.xpose.msra.mxu0 0.0
    %285 = vmatpush.xpose.msra.mxu0 0.0
    %286 = vmatpush.xpose.msra.mxu0 0.0
    %287 = vmatpush.xpose.msra.mxu0 0.0
    %288 = vmatpush.xpose.msra.mxu0 0.0
    %289 = vmatpush.xpose.msra.mxu0 %v272
    %290 = vmatmul.f32.gmra.mxu0 %v268
    %v291 = vpop.f32.mrf.mxu0
    %v292 = vadd.f32 0.0, %v291
    %293 = vmatmul.f32.gmra.mxu0 %v270
    %v294 = vpop.f32.mrf.mxu0
    %v295 = vadd.f32 0.0, %v294
    %296 = vdwg.mxu0
    %v297 = vsel %vm180, %v153, 0
    %v299 = vsel %vm180, %v155, 0
    %v301 = vsel %vm180, %v173, 0
    %303 = vmatpush.xpose.msra.mxu0 0.0
    %304 = vmatpush.xpose.msra.mxu0 0.0
    %305 = vmatpush.xpose.msra.mxu0 0.0
    %306 = vmatpush.xpose.msra.mxu0 0.0
    %307 = vmatpush.xpose.msra.mxu0 0.0
    %308 = vmatpush.xpose.msra.mxu0 0.0
    %309 = vmatpush.xpose.msra.mxu0 0.0
    %310 = vmatpush.xpose.msra.mxu0 0.0
    %311 = vmatpush.xpose.msra.mxu0 0.0
    %312 = vmatpush.xpose.msra.mxu0 0.0
    %313 = vmatpush.xpose.msra.mxu0 0.0
    %314 = vmatpush.xpose.msra.mxu0 0.0
    %315 = vmatpush.xpose.msra.mxu0 0.0
    %316 = vmatpush.xpose.msra.mxu0 0.0
    %317 = vmatpush.xpose.msra.mxu0 0.0
    %318 = vmatpush.xpose.msra.mxu0 %v301
    %319 = vmatmul.f32.gmra.mxu0 %v297
    %v320 = vpop.f32.mrf.mxu0
    %v321 = vadd.f32 0.0, %v320
    %322 = vmatmul.f32.gmra.mxu0 %v299
    %v323 = vpop.f32.mrf.mxu0
    %v324 = vadd.f32 0.0, %v323
    %325 = vdwg.mxu0
    %v326 = vsel %vm180, %v157, 0
    %v328 = vsel %vm180, %v159, 0
    %v330 = vsel %vm180, %v175, 0
    %332 = vmatpush.xpose.msra.mxu0 0.0
    %333 = vmatpush.xpose.msra.mxu0 0.0
    %334 = vmatpush.xpose.msra.mxu0 0.0
    %335 = vmatpush.xpose.msra.mxu0 0.0
    %336 = vmatpush.xpose.msra.mxu0 0.0
    %337 = vmatpush.xpose.msra.mxu0 0.0
    %338 = vmatpush.xpose.msra.mxu0 0.0
    %339 = vmatpush.xpose.msra.mxu0 0.0
    %340 = vmatpush.xpose.msra.mxu0 0.0
    %341 = vmatpush.xpose.msra.mxu0 0.0
    %342 = vmatpush.xpose.msra.mxu0 0.0
    %343 = vmatpush.xpose.msra.mxu0 0.0
    %344 = vmatpush.xpose.msra.mxu0 0.0
    %345 = vmatpush.xpose.msra.mxu0 0.0
    %346 = vmatpush.xpose.msra.mxu0 0.0
    %347 = vmatpush.xpose.msra.mxu0 %v330
    %348 = vmatmul.f32.gmra.mxu0 %v326
    %v349 = vpop.f32.mrf.mxu0
    %v350 = vadd.f32 0.0, %v349
    %351 = vmatmul.f32.gmra.mxu0 %v328
    %v352 = vpop.f32.mrf.mxu0
    %v353 = vadd.f32 0.0, %v352
    %354 = vdwg.mxu0
    %v355 = vsel %vm180, %v161, 0
    %v357 = vsel %vm180, %v163, 0
    %v359 = vsel %vm180, %v177, 0
    %361 = vmatpush.xpose.msra.mxu0 0.0
    %362 = vmatpush.xpose.msra.mxu0 0.0
    %363 = vmatpush.xpose.msra.mxu0 0.0
    %364 = vmatpush.xpose.msra.mxu0 0.0
    %365 = vmatpush.xpose.msra.mxu0 0.0
    %366 = vmatpush.xpose.msra.mxu0 0.0
    %367 = vmatpush.xpose.msra.mxu0 0.0
    %368 = vmatpush.xpose.msra.mxu0 0.0
    %369 = vmatpush.xpose.msra.mxu0 0.0
    %370 = vmatpush.xpose.msra.mxu0 0.0
    %371 = vmatpush.xpose.msra.mxu0 0.0
    %372 = vmatpush.xpose.msra.mxu0 0.0
    %373 = vmatpush.xpose.msra.mxu0 0.0
    %374 = vmatpush.xpose.msra.mxu0 0.0
    %375 = vmatpush.xpose.msra.mxu0 0.0
    %376 = vmatpush.xpose.msra.mxu0 %v359
    %377 = vmatmul.f32.gmra.mxu0 %v355
    %v378 = vpop.f32.mrf.mxu0
    %v379 = vadd.f32 0.0, %v378
    %380 = vmatmul.f32.gmra.mxu0 %v357
    %v381 = vpop.f32.mrf.mxu0
    %v382 = vadd.f32 0.0, %v381
    %383 = vdwg.mxu0
    %v384 = vsel %vm180, %v165, 0
    %v386 = vsel %vm180, %v167, 0
    %v388 = vsel %vm180, %v179, 0
    %390 = vmatpush.xpose.msra.mxu0 0.0
    %391 = vmatpush.xpose.msra.mxu0 0.0
    %392 = vmatpush.xpose.msra.mxu0 0.0
    %393 = vmatpush.xpose.msra.mxu0 0.0
    %394 = vmatpush.xpose.msra.mxu0 0.0
    %395 = vmatpush.xpose.msra.mxu0 0.0
    %396 = vmatpush.xpose.msra.mxu0 0.0
    %397 = vmatpush.xpose.msra.mxu0 0.0
    %398 = vmatpush.xpose.msra.mxu0 0.0
    %399 = vmatpush.xpose.msra.mxu0 0.0
    %400 = vmatpush.xpose.msra.mxu0 0.0
    %401 = vmatpush.xpose.msra.mxu0 0.0
    %402 = vmatpush.xpose.msra.mxu0 0.0
    %403 = vmatpush.xpose.msra.mxu0 0.0
    %404 = vmatpush.xpose.msra.mxu0 0.0
    %405 = vmatpush.xpose.msra.mxu0 %v388
    %406 = vmatmul.f32.gmra.mxu0 %v384
    %v407 = vpop.f32.mrf.mxu0
    %v408 = vadd.f32 0.0, %v407
    %409 = vmatmul.f32.gmra.mxu0 %v386
    %v410 = vpop.f32.mrf.mxu0
    %v411 = vadd.f32 0.0, %v410
    %412 = vdwg.mxu0
    %vm413 = vcmask 31744
    %v414 = vsel %vm413, %v205, -inf
    %415 = vmax.xlane.f32.xlu0 %v414
    %v416 = vpop.xlane.xlu0 %415
    %v417 = vsel %vm413, %v208, -inf
    %418 = vmax.xlane.f32.xlu0 %v417
    %v419 = vpop.xlane.xlu0 %418
    %v420 = vsel %vm413, %v234, -inf
    %421 = vmax.xlane.f32.xlu0 %v420
    %v422 = vpop.xlane.xlu0 %421
    %v423 = vsel %vm413, %v237, -inf
    %424 = vmax.xlane.f32.xlu0 %v423
    %v425 = vpop.xlane.xlu0 %424
    %v426 = vsel %vm413, %v263, -inf
    %427 = vmax.xlane.f32.xlu0 %v426
    %v428 = vpop.xlane.xlu0 %427
    %v429 = vsel %vm413, %v266, -inf
    %430 = vmax.xlane.f32.xlu0 %v429
    %v431 = vpop.xlane.xlu0 %430
    %v432 = vsel %vm413, %v292, -inf
    %433 = vmax.xlane.f32.xlu0 %v432
    %v434 = vpop.xlane.xlu0 %433
    %v435 = vsel %vm413, %v295, -inf
    %436 = vmax.xlane.f32.xlu0 %v435
    %v437 = vpop.xlane.xlu0 %436
    %v438 = vsel %vm413, %v321, -inf
    %439 = vmax.xlane.f32.xlu0 %v438
    %v440 = vpop.xlane.xlu0 %439
    %v441 = vsel %vm413, %v324, -inf
    %442 = vmax.xlane.f32.xlu0 %v441
    %v443 = vpop.xlane.xlu0 %442
    %v444 = vsel %vm413, %v350, -inf
    %445 = vmax.xlane.f32.xlu0 %v444
    %v446 = vpop.xlane.xlu0 %445
    %v447 = vsel %vm413, %v353, -inf
    %448 = vmax.xlane.f32.xlu0 %v447
    %v449 = vpop.xlane.xlu0 %448
    %v450 = vsel %vm413, %v379, -inf
    %451 = vmax.xlane.f32.xlu0 %v450
    %v452 = vpop.xlane.xlu0 %451
    %v453 = vsel %vm413, %v382, -inf
    %454 = vmax.xlane.f32.xlu0 %v453
    %v455 = vpop.xlane.xlu0 %454
    %v456 = vsel %vm413, %v408, -inf
    %457 = vmax.xlane.f32.xlu0 %v456
    %v458 = vpop.xlane.xlu0 %457
    %v459 = vsel %vm413, %v411, -inf
    %460 = vmax.xlane.f32.xlu0 %v459
    %v461 = vpop.xlane.xlu0 %460
    %v462 = vsub.f32 %v205, %v416
    %v463 = vsub.f32 %v208, %v419
    %v464 = vsub.f32 %v234, %v422
    %v465 = vsub.f32 %v237, %v425
    %v466 = vsub.f32 %v263, %v428
    %v467 = vsub.f32 %v266, %v431
    %v468 = vsub.f32 %v292, %v434
    %v469 = vsub.f32 %v295, %v437
    %v470 = vsub.f32 %v321, %v440
    %v471 = vsub.f32 %v324, %v443
    %v472 = vsub.f32 %v350, %v446
    %v473 = vsub.f32 %v353, %v449
    %v474 = vsub.f32 %v379, %v452
    %v475 = vsub.f32 %v382, %v455
    %v476 = vsub.f32 %v408, %v458
    %v477 = vsub.f32 %v411, %v461
    %v478 = vmul.f32 %v462, 1.442695
    %v479 = vpow.pop %v478
    %v480 = vmul.f32 %v463, 1.442695
    %v481 = vpow.pop %v480
    %v482 = vmul.f32 %v464, 1.442695
    %v483 = vpow.pop %v482
    %v484 = vmul.f32 %v465, 1.442695
    %v485 = vpow.pop %v484
    %v486 = vmul.f32 %v466, 1.442695
    %v487 = vpow.pop %v486
    %v488 = vmul.f32 %v467, 1.442695
    %v489 = vpow.pop %v488
    %v490 = vmul.f32 %v468, 1.442695
    %v491 = vpow.pop %v490
    %v492 = vmul.f32 %v469, 1.442695
    %v493 = vpow.pop %v492
    %v494 = vmul.f32 %v470, 1.442695
    %v495 = vpow.pop %v494
    %v496 = vmul.f32 %v471, 1.442695
    %v497 = vpow.pop %v496
    %v498 = vmul.f32 %v472, 1.442695
    %v499 = vpow.pop %v498
    %v500 = vmul.f32 %v473, 1.442695
    %v501 = vpow.pop %v500
    %v502 = vmul.f32 %v474, 1.442695
    %v503 = vpow.pop %v502
    %v504 = vmul.f32 %v475, 1.442695
    %v505 = vpow.pop %v504
    %v506 = vmul.f32 %v476, 1.442695
    %v507 = vpow.pop %v506
    %v508 = vmul.f32 %v477, 1.442695
    %v509 = vpow.pop %v508
    %v510 = vsel %vm413, %v479, 0.0
    %511 = vadd.xlane.f32.xlu0 %v510
    %v512 = vpop.xlane.xlu0 %511
    %v513 = vsel %vm413, %v481, 0.0
    %514 = vadd.xlane.f32.xlu0 %v513
    %v515 = vpop.xlane.xlu0 %514
    %v516 = vsel %vm413, %v483, 0.0
    %517 = vadd.xlane.f32.xlu0 %v516
    %v518 = vpop.xlane.xlu0 %517
    %v519 = vsel %vm413, %v485, 0.0
    %520 = vadd.xlane.f32.xlu0 %v519
    %v521 = vpop.xlane.xlu0 %520
    %v522 = vsel %vm413, %v487, 0.0
    %523 = vadd.xlane.f32.xlu0 %v522
    %v524 = vpop.xlane.xlu0 %523
    %v525 = vsel %vm413, %v489, 0.0
    %526 = vadd.xlane.f32.xlu0 %v525
    %v527 = vpop.xlane.xlu0 %526
    %v528 = vsel %vm413, %v491, 0.0
    %529 = vadd.xlane.f32.xlu0 %v528
    %v530 = vpop.xlane.xlu0 %529
    %v531 = vsel %vm413, %v493, 0.0
    %532 = vadd.xlane.f32.xlu0 %v531
    %v533 = vpop.xlane.xlu0 %532
    %v534 = vsel %vm413, %v495, 0.0
    %535 = vadd.xlane.f32.xlu0 %v534
    %v536 = vpop.xlane.xlu0 %535
    %v537 = vsel %vm413, %v497, 0.0
    %538 = vadd.xlane.f32.xlu0 %v537
    %v539 = vpop.xlane.xlu0 %538
    %v540 = vsel %vm413, %v499, 0.0
    %541 = vadd.xlane.f32.xlu0 %v540
    %v542 = vpop.xlane.xlu0 %541
    %v543 = vsel %vm413, %v501, 0.0
    %544 = vadd.xlane.f32.xlu0 %v543
    %v545 = vpop.xlane.xlu0 %544
    %v546 = vsel %vm413, %v503, 0.0
    %547 = vadd.xlane.f32.xlu0 %v546
    %v548 = vpop.xlane.xlu0 %547
    %v549 = vsel %vm413, %v505, 0.0
    %550 = vadd.xlane.f32.xlu0 %v549
    %v551 = vpop.xlane.xlu0 %550
    %v552 = vsel %vm413, %v507, 0.0
    %553 = vadd.xlane.f32.xlu0 %v552
    %v554 = vpop.xlane.xlu0 %553
    %v555 = vsel %vm413, %v509, 0.0
    %556 = vadd.xlane.f32.xlu0 %v555
    %v557 = vpop.xlane.xlu0 %556
    %558 = vst [vmem:[#allocation1] ss:$2 sm:$0xff] %v136
    %v559 = vld.sshfl [vmem:[#allocation1] sm:$0xff pattern:$0x75316420]
    %560 = vrot.lane.b32.xlu0 %v559, 96
    %v561 = vpop.permute.xlu0 %560
    %v563 = vsel %vm413, %v479, 0
    %v566 = vsel %vm413, %v481, 0
    %vm568 = vcmask 1043456
    %v569 = vsel %vm568, %v561, 0
    %571 = vmatpush.msra.mxu0 0.0
    %572 = vmatpush.msra.mxu0 0.0
    %573 = vmatpush.msra.mxu0 0.0
    %574 = vmatpush.msra.mxu0 0.0
    %575 = vmatpush.msra.mxu0 0.0
    %576 = vmatpush.msra.mxu0 0.0
    %577 = vmatpush.msra.mxu0 0.0
    %578 = vmatpush.msra.mxu0 0.0
    %579 = vmatpush.msra.mxu0 0.0
    %580 = vmatpush.msra.mxu0 0.0
    %581 = vmatpush.msra.mxu0 0.0
    %582 = vmatpush.msra.mxu0 0.0
    %583 = vmatpush.msra.mxu0 0.0
    %584 = vmatpush.msra.mxu0 0.0
    %585 = vmatpush.msra.mxu0 0.0
    %586 = vmatpush.msra.mxu0 %v569
    %587 = vmatmul.f32.gmra.mxu0 %v563
    %v588 = vpop.f32.mrf.mxu0
    %v589 = vadd.f32 0.0, %v588
    %590 = vmatmul.f32.gmra.mxu0 %v566
    %v591 = vpop.f32.mrf.mxu0
    %v592 = vadd.f32 0.0, %v591
    %593 = vdwg.mxu0
    %594 = vst [vmem:[#allocation1] ss:$2 sm:$0xff] %v139
    %v595 = vld.sshfl [vmem:[#allocation1] sm:$0xff pattern:$0x75316420]
    %596 = vrot.lane.b32.xlu0 %v595, 96
    %v597 = vpop.permute.xlu0 %596
    %v599 = vsel %vm413, %v483, 0
    %v602 = vsel %vm413, %v485, 0
    %v604 = vsel %vm568, %v597, 0
    %606 = vmatpush.msra.mxu0 0.0
    %607 = vmatpush.msra.mxu0 0.0
    %608 = vmatpush.msra.mxu0 0.0
    %609 = vmatpush.msra.mxu0 0.0
    %610 = vmatpush.msra.mxu0 0.0
    %611 = vmatpush.msra.mxu0 0.0
    %612 = vmatpush.msra.mxu0 0.0
    %613 = vmatpush.msra.mxu0 0.0
    %614 = vmatpush.msra.mxu0 0.0
    %615 = vmatpush.msra.mxu0 0.0
    %616 = vmatpush.msra.mxu0 0.0
    %617 = vmatpush.msra.mxu0 0.0
    %618 = vmatpush.msra.mxu0 0.0
    %619 = vmatpush.msra.mxu0 0.0
    %620 = vmatpush.msra.mxu0 0.0
    %621 = vmatpush.msra.mxu0 %v604
    %622 = vmatmul.f32.gmra.mxu0 %v599
    %v623 = vpop.f32.mrf.mxu0
    %v624 = vadd.f32 0.0, %v623
    %625 = vmatmul.f32.gmra.mxu0 %v602
    %v626 = vpop.f32.mrf.mxu0
    %v627 = vadd.f32 0.0, %v626
    %628 = vdwg.mxu0
    %629 = vst [vmem:[#allocation1] ss:$2 sm:$0xff] %v169
    %v630 = vld.sshfl [vmem:[#allocation1] sm:$0xff pattern:$0x75316420]
    %631 = vrot.lane.b32.xlu0 %v630, 96
    %v632 = vpop.permute.xlu0 %631
    %v634 = vsel %vm413, %v487, 0
    %v637 = vsel %vm413, %v489, 0
    %v639 = vsel %vm568, %v632, 0
    %641 = vmatpush.msra.mxu0 0.0
    %642 = vmatpush.msra.mxu0 0.0
    %643 = vmatpush.msra.mxu0 0.0
    %644 = vmatpush.msra.mxu0 0.0
    %645 = vmatpush.msra.mxu0 0.0
    %646 = vmatpush.msra.mxu0 0.0
    %647 = vmatpush.msra.mxu0 0.0
    %648 = vmatpush.msra.mxu0 0.0
    %649 = vmatpush.msra.mxu0 0.0
    %650 = vmatpush.msra.mxu0 0.0
    %651 = vmatpush.msra.mxu0 0.0
    %652 = vmatpush.msra.mxu0 0.0
    %653 = vmatpush.msra.mxu0 0.0
    %654 = vmatpush.msra.mxu0 0.0
    %655 = vmatpush.msra.mxu0 0.0
    %656 = vmatpush.msra.mxu0 %v639
    %657 = vmatmul.f32.gmra.mxu0 %v634
    %v658 = vpop.f32.mrf.mxu0
    %v659 = vadd.f32 0.0, %v658
    %660 = vmatmul.f32.gmra.mxu0 %v637
    %v661 = vpop.f32.mrf.mxu0
    %v662 = vadd.f32 0.0, %v661
    %663 = vdwg.mxu0
    %664 = vst [vmem:[#allocation1] ss:$2 sm:$0xff] %v171
    %v665 = vld.sshfl [vmem:[#allocation1] sm:$0xff pattern:$0x75316420]
    %666 = vrot.lane.b32.xlu0 %v665, 96
    %v667 = vpop.permute.xlu0 %666
    %v669 = vsel %vm413, %v491, 0
    %v672 = vsel %vm413, %v493, 0
    %v674 = vsel %vm568, %v667, 0
    %676 = vmatpush.msra.mxu0 0.0
    %677 = vmatpush.msra.mxu0 0.0
    %678 = vmatpush.msra.mxu0 0.0
    %679 = vmatpush.msra.mxu0 0.0
    %680 = vmatpush.msra.mxu0 0.0
    %681 = vmatpush.msra.mxu0 0.0
    %682 = vmatpush.msra.mxu0 0.0
    %683 = vmatpush.msra.mxu0 0.0
    %684 = vmatpush.msra.mxu0 0.0
    %685 = vmatpush.msra.mxu0 0.0
    %686 = vmatpush.msra.mxu0 0.0
    %687 = vmatpush.msra.mxu0 0.0
    %688 = vmatpush.msra.mxu0 0.0
    %689 = vmatpush.msra.mxu0 0.0
    %690 = vmatpush.msra.mxu0 0.0
    %691 = vmatpush.msra.mxu0 %v674
    %692 = vmatmul.f32.gmra.mxu0 %v669
    %v693 = vpop.f32.mrf.mxu0
    %v694 = vadd.f32 0.0, %v693
    %695 = vmatmul.f32.gmra.mxu0 %v672
    %v696 = vpop.f32.mrf.mxu0
    %v697 = vadd.f32 0.0, %v696
    %698 = vdwg.mxu0
    %699 = vst [vmem:[#allocation1] ss:$2 sm:$0xff] %v173
    %v700 = vld.sshfl [vmem:[#allocation1] sm:$0xff pattern:$0x75316420]
    %701 = vrot.lane.b32.xlu0 %v700, 96
    %v702 = vpop.permute.xlu0 %701
    %v704 = vsel %vm413, %v495, 0
    %v707 = vsel %vm413, %v497, 0
    %v709 = vsel %vm568, %v702, 0
    %711 = vmatpush.msra.mxu0 0.0
    %712 = vmatpush.msra.mxu0 0.0
    %713 = vmatpush.msra.mxu0 0.0
    %714 = vmatpush.msra.mxu0 0.0
    %715 = vmatpush.msra.mxu0 0.0
    %716 = vmatpush.msra.mxu0 0.0
    %717 = vmatpush.msra.mxu0 0.0
    %718 = vmatpush.msra.mxu0 0.0
    %719 = vmatpush.msra.mxu0 0.0
    %720 = vmatpush.msra.mxu0 0.0
    %721 = vmatpush.msra.mxu0 0.0
    %722 = vmatpush.msra.mxu0 0.0
    %723 = vmatpush.msra.mxu0 0.0
    %724 = vmatpush.msra.mxu0 0.0
    %725 = vmatpush.msra.mxu0 0.0
    %726 = vmatpush.msra.mxu0 %v709
    %727 = vmatmul.f32.gmra.mxu0 %v704
    %v728 = vpop.f32.mrf.mxu0
    %v729 = vadd.f32 0.0, %v728
    %730 = vmatmul.f32.gmra.mxu0 %v707
    %v731 = vpop.f32.mrf.mxu0
    %v732 = vadd.f32 0.0, %v731
    %733 = vdwg.mxu0
    %734 = vst [vmem:[#allocation1] ss:$2 sm:$0xff] %v175
    %v735 = vld.sshfl [vmem:[#allocation1] sm:$0xff pattern:$0x75316420]
    %736 = vrot.lane.b32.xlu0 %v735, 96
    %v737 = vpop.permute.xlu0 %736
    %v739 = vsel %vm413, %v499, 0
    %v742 = vsel %vm413, %v501, 0
    %v744 = vsel %vm568, %v737, 0
    %746 = vmatpush.msra.mxu0 0.0
    %747 = vmatpush.msra.mxu0 0.0
    %748 = vmatpush.msra.mxu0 0.0
    %749 = vmatpush.msra.mxu0 0.0
    %750 = vmatpush.msra.mxu0 0.0
    %751 = vmatpush.msra.mxu0 0.0
    %752 = vmatpush.msra.mxu0 0.0
    %753 = vmatpush.msra.mxu0 0.0
    %754 = vmatpush.msra.mxu0 0.0
    %755 = vmatpush.msra.mxu0 0.0
    %756 = vmatpush.msra.mxu0 0.0
    %757 = vmatpush.msra.mxu0 0.0
    %758 = vmatpush.msra.mxu0 0.0
    %759 = vmatpush.msra.mxu0 0.0
    %760 = vmatpush.msra.mxu0 0.0
    %761 = vmatpush.msra.mxu0 %v744
    %762 = vmatmul.f32.gmra.mxu0 %v739
    %v763 = vpop.f32.mrf.mxu0
    %v764 = vadd.f32 0.0, %v763
    %765 = vmatmul.f32.gmra.mxu0 %v742
    %v766 = vpop.f32.mrf.mxu0
    %v767 = vadd.f32 0.0, %v766
    %768 = vdwg.mxu0
    %769 = vst [vmem:[#allocation1] ss:$2 sm:$0xff] %v177
    %v770 = vld.sshfl [vmem:[#allocation1] sm:$0xff pattern:$0x75316420]
    %771 = vrot.lane.b32.xlu0 %v770, 96
    %v772 = vpop.permute.xlu0 %771
    %v774 = vsel %vm413, %v503, 0
    %v777 = vsel %vm413, %v505, 0
    %v779 = vsel %vm568, %v772, 0
    %781 = vmatpush.msra.mxu0 0.0
    %782 = vmatpush.msra.mxu0 0.0
    %783 = vmatpush.msra.mxu0 0.0
    %784 = vmatpush.msra.mxu0 0.0
    %785 = vmatpush.msra.mxu0 0.0
    %786 = vmatpush.msra.mxu0 0.0
    %787 = vmatpush.msra.mxu0 0.0
    %788 = vmatpush.msra.mxu0 0.0
    %789 = vmatpush.msra.mxu0 0.0
    %790 = vmatpush.msra.mxu0 0.0
    %791 = vmatpush.msra.mxu0 0.0
    %792 = vmatpush.msra.mxu0 0.0
    %793 = vmatpush.msra.mxu0 0.0
    %794 = vmatpush.msra.mxu0 0.0
    %795 = vmatpush.msra.mxu0 0.0
    %796 = vmatpush.msra.mxu0 %v779
    %797 = vmatmul.f32.gmra.mxu0 %v774
    %v798 = vpop.f32.mrf.mxu0
    %v799 = vadd.f32 0.0, %v798
    %800 = vmatmul.f32.gmra.mxu0 %v777
    %v801 = vpop.f32.mrf.mxu0
    %v802 = vadd.f32 0.0, %v801
    %803 = vdwg.mxu0
    %804 = vst [vmem:[#allocation1] ss:$2 sm:$0xff] %v179
    %v805 = vld.sshfl [vmem:[#allocation1] sm:$0xff pattern:$0x75316420]
    %806 = vrot.lane.b32.xlu0 %v805, 96
    %v807 = vpop.permute.xlu0 %806
    %v809 = vsel %vm413, %v507, 0
    %v812 = vsel %vm413, %v509, 0
    %v814 = vsel %vm568, %v807, 0
    %816 = vmatpush.msra.mxu0 0.0
    %817 = vmatpush.msra.mxu0 0.0
    %818 = vmatpush.msra.mxu0 0.0
    %819 = vmatpush.msra.mxu0 0.0
    %820 = vmatpush.msra.mxu0 0.0
    %821 = vmatpush.msra.mxu0 0.0
    %822 = vmatpush.msra.mxu0 0.0
    %823 = vmatpush.msra.mxu0 0.0
    %824 = vmatpush.msra.mxu0 0.0
    %825 = vmatpush.msra.mxu0 0.0
    %826 = vmatpush.msra.mxu0 0.0
    %827 = vmatpush.msra.mxu0 0.0
    %828 = vmatpush.msra.mxu0 0.0
    %829 = vmatpush.msra.mxu0 0.0
    %830 = vmatpush.msra.mxu0 0.0
    %831 = vmatpush.msra.mxu0 %v814
    %832 = vmatmul.f32.gmra.mxu0 %v809
    %v833 = vpop.f32.mrf.mxu0
    %v834 = vadd.f32 0.0, %v833
    %835 = vmatmul.f32.gmra.mxu0 %v812
    %v836 = vpop.f32.mrf.mxu0
    %v837 = vadd.f32 0.0, %v836
    %838 = vdwg.mxu0
    %v839 = vrcp.pop %v512
    %v840 = vrcp.pop %v515
    %v841 = vrcp.pop %v518
    %v842 = vrcp.pop %v521
    %v843 = vrcp.pop %v524
    %v844 = vrcp.pop %v527
    %v845 = vrcp.pop %v530
    %v846 = vrcp.pop %v533
    %v847 = vrcp.pop %v536
    %v848 = vrcp.pop %v539
    %v849 = vrcp.pop %v542
    %v850 = vrcp.pop %v545
    %v851 = vrcp.pop %v548
    %v852 = vrcp.pop %v551
    %v853 = vrcp.pop %v554
    %v854 = vrcp.pop %v557
    %v855 = vmul.f32 %v589, %v839
    %v856 = vmul.f32 %v592, %v840
    %v857 = vmul.f32 %v624, %v841
    %v858 = vmul.f32 %v627, %v842
    %v859 = vmul.f32 %v659, %v843
    %v860 = vmul.f32 %v662, %v844
    %v861 = vmul.f32 %v694, %v845
    %v862 = vmul.f32 %v697, %v846
    %v863 = vmul.f32 %v729, %v847
    %v864 = vmul.f32 %v732, %v848
    %v865 = vmul.f32 %v764, %v849
    %v866 = vmul.f32 %v767, %v850
    %v867 = vmul.f32 %v799, %v851
    %v868 = vmul.f32 %v802, %v852
    %v869 = vmul.f32 %v834, %v853
    %v870 = vmul.f32 %v837, %v854
    %875 = vrot.lane.b32.xlu0 %v859, 8
    %v876 = vpop.permute.xlu0 %875
    %877 = vrot.lane.b32.xlu0 %v860, 8
    %v878 = vpop.permute.xlu0 %877
    %879 = vrot.lane.b32.xlu0 %v861, 8
    %v880 = vpop.permute.xlu0 %879
    %881 = vrot.lane.b32.xlu0 %v862, 8
    %v882 = vpop.permute.xlu0 %881
    %891 = vrot.lane.b32.xlu0 %v863, 16
    %v892 = vpop.permute.xlu0 %891
    %893 = vrot.lane.b32.xlu0 %v864, 16
    %v894 = vpop.permute.xlu0 %893
    %895 = vrot.lane.b32.xlu0 %v865, 16
    %v896 = vpop.permute.xlu0 %895
    %897 = vrot.lane.b32.xlu0 %v866, 16
    %v898 = vpop.permute.xlu0 %897
    %907 = vrot.lane.b32.xlu0 %v867, 24
    %v908 = vpop.permute.xlu0 %907
    %909 = vrot.lane.b32.xlu0 %v868, 24
    %v910 = vpop.permute.xlu0 %909
    %911 = vrot.lane.b32.xlu0 %v869, 24
    %v912 = vpop.permute.xlu0 %911
    %913 = vrot.lane.b32.xlu0 %v870, 24
    %v914 = vpop.permute.xlu0 %913
    %v919 = vsel %vm180, %v855, %v876
    %v920 = vsel %vm180, %v856, %v878
    %v921 = vsel %vm180, %v857, %v880
    %v922 = vsel %vm180, %v858, %v882
    %vm923 = vcmask 130048
    %v924 = vsel %vm923, %v919, %v892
    %v925 = vsel %vm923, %v920, %v894
    %v926 = vsel %vm923, %v921, %v896
    %v927 = vsel %vm923, %v922, %v898
    %vm928 = vcmask 195584
    %v929 = vsel %vm928, %v924, %v908
    %v930 = vsel %vm928, %v925, %v910
    %v931 = vsel %vm928, %v926, %v912
    %v932 = vsel %vm928, %v927, %v914
    %v933 = vld [vmem:[%s5] sm:$0xff]
    %v934 = vld [vmem:[%s5 + $0x8] sm:$0xff]
    %v935 = vld [vmem:[%s5 + $0x10] sm:$0xff]
    %v936 = vld [vmem:[%s5 + $0x18] sm:$0xff]
    %v937 = vld [vmem:[%s6] sm:$0x1]
    %v939 = vperm.slane %v937, 0
    %v942 = vsel %vm32, %v929, 0
    %v945 = vsel %vm32, %v930, 0
    %v948 = vsel %vm32, %v931, 0
    %v951 = vsel %vm32, %v932, 0
    %953 = vmatpush.msra.mxu0 0.0
    %954 = vmatpush.msra.mxu0 0.0
    %955 = vmatpush.msra.mxu0 0.0
    %956 = vmatpush.msra.mxu0 0.0
    %957 = vmatpush.msra.mxu0 0.0
    %958 = vmatpush.msra.mxu0 0.0
    %959 = vmatpush.msra.mxu0 0.0
    %960 = vmatpush.msra.mxu0 0.0
    %961 = vmatpush.msra.mxu0 0.0
    %962 = vmatpush.msra.mxu0 0.0
    %963 = vmatpush.msra.mxu0 0.0
    %964 = vmatpush.msra.mxu0 0.0
    %965 = vmatpush.msra.mxu0 %v936
    %966 = vmatpush.msra.mxu0 %v935
    %967 = vmatpush.msra.mxu0 %v934
    %968 = vmatpush.msra.mxu0 %v933
    %969 = vmatmul.f32.gmra.mxu0 %v942
    %v970 = vpop.f32.mrf.mxu0
    %v971 = vadd.f32 %v939, %v970
    %972 = vmatmul.f32.gmra.mxu0 %v945
    %v973 = vpop.f32.mrf.mxu0
    %v974 = vadd.f32 %v939, %v973
    %975 = vmatmul.f32.gmra.mxu0 %v948
    %v976 = vpop.f32.mrf.mxu0
    %v977 = vadd.f32 %v939, %v976
    %978 = vmatmul.f32.gmra.mxu0 %v951
    %v979 = vpop.f32.mrf.mxu0
    %v980 = vadd.f32 %v939, %v979
    %981 = vdwg.mxu0
    %982 = vst.msk [vmem:[#allocation2] sm:$0xff] %vm32, %v971
    %983 = vst.msk [vmem:[#allocation2 + $0x8] sm:$0xff] %vm32, %v974
    %984 = vst.msk [vmem:[#allocation2 + $0x10] sm:$0xff] %vm32, %v977
    %985 = vst.msk [vmem:[#allocation2 + $0x18] sm:$0xff] %vm32, %v980
    // Predicated region
    $region30: #{attention_forward.1} parent=1 // pred_check
      _
    $region31: #{attention_forward.1} parent=1 // pred_check_branch
      %987 = sbr.rel (0) target = $region33
    $region32: #{attention_forward.1} parent=1 // pred_region
      %989 = vsyncadd [#allocation3], 0
      %s990 = sshll.u32 [#allocation2], 4
      %s991 = int_to_ptr.vmem [resolvable:$true] %s990
      %s992 = sshll.u32 %s7, 4
      %s993 = int_to_ptr.hbm [resolvable:$true] %s992
      %998 = dma.vmem_to_hbm [thread:$0]  %s991, 512, %s993, [#allocation3], 128, 128, 8
    $region33: #{attention_forward.1} parent=1 // pred_fallthru
      _
    // Predicated region
    $region34: #{attention_forward.1} parent=1 // pred_check
      _
    $region35: #{attention_forward.1} parent=1 // pred_check_branch
      %1000 = sbr.rel (0) target = $region37
    $region36: #{attention_forward.1} parent=1 // pred_region
      %1002 = dma.done [#allocation3], 512
    $region37: #{attention_forward.1} parent=1 // pred_fallthru
      _
    %1003 = vsyncpa [#allocation3], 1

</llo_original>
